<compile_context>
chip_gen: v6e
topology: v6e:2x2x1
jax: 0.10.0
libtpu: 0.0.40
codegen_flags: <defaults>
</compile_context>

<pallas_src>
import functools

import jax
import jax.numpy as jnp
from jax import lax
from jax.experimental import pallas as pl
from jax.experimental.pallas import tpu as pltpu


def _round_up(x, m):
    return (x + m - 1) // m * m


def _gaussian_encoder_kernel(x_ref, w1_ref, b1_ref, w2_ref, b2_ref, out_ref,
                             *, latent_dim):
    # x_ref: (TB, D) f32 | w1_ref: (D, H) bf16 | b1_ref: (1, H) f32
    # w2_ref: (H, Npad) bf16 packed [mean | std | zero-pad] | b2_ref: (1, Npad) f32
    # out_ref: (TB, Npad) f32 — lane-dense, single slab per tile.
    x = x_ref[...].astype(jnp.bfloat16)                  # cast in VPU; x crosses HBM once (f32)
    h = jnp.dot(x, w1_ref[...],
                preferred_element_type=jnp.float32) + b1_ref[...]
    h = jnp.maximum(h, 0.0).astype(jnp.bfloat16)         # ReLU in f32, back to bf16 for MXU
    # One fused second-layer matmul covers both mean and std columns.
    y = jnp.dot(h, w2_ref[...],
                preferred_element_type=jnp.float32) + b2_ref[...]
    # scale = exp(std) only on the std lanes [M, 2M); mean lanes pass through.
    col = lax.broadcasted_iota(jnp.int32, y.shape, 1)
    is_std = (col >= latent_dim) & (col < 2 * latent_dim)
    out_ref[...] = jnp.where(is_std, jnp.exp(y), y)


def prepare_gaussian_encoder_params(w1, b1, w2, b2, latent_dim):
    """One-time weight prep (pad / cast) — hoisted out of the per-forward path."""
    D, H = w1.shape
    M = latent_dim
    Npad = _round_up(max(2 * M, 128), 128)               # lane-dense packed output width
    w2p = jnp.pad(w2, ((0, 0), (0, Npad - 2 * M))).astype(jnp.bfloat16)
    b2p = jnp.pad(b2.reshape(1, 2 * M), ((0, 0), (0, Npad - 2 * M))).astype(jnp.float32)
    return dict(
        w1=w1.astype(jnp.bfloat16),
        b1=b1.reshape(1, H).astype(jnp.float32),
        w2=w2p,
        b2=b2p,
        latent_dim=M,
        in_dim=D,
        hidden=H,
        out_pad=Npad,
    )


def gaussian_encoder(x, params, *, batch_tile=512):
    """x: (B, F1, F2) float32. Returns (mean, scale), each (B, latent_dim) float32."""
    B, F1, F2 = x.shape
    D = params["in_dim"]
    H = params["hidden"]
    M = params["latent_dim"]
    Npad = params["out_pad"]
    assert F1 * F2 == D

    x_flat = x.reshape(B, D).astype(jnp.float32)         # Flatten only; no cast/pad HBM pass

    # Generation-aware VMEM budget (128 MiB on v5e/v6e, 64 MiB per TC on v7x).
    try:
        vmem_cap = int(pltpu.get_tpu_info().vmem_capacity_bytes)
    except Exception:
        vmem_cap = 64 << 20                               # conservative (v7x) fallback
    vmem_budget = vmem_cap * 3 // 4

    # Budget assumes 2 pipeline buffers per input spec (incl. the grid-invariant
    # weights) so the declared vmem_limit is a true upper bound for the pipeline.
    weight_bytes = 2 * (D * H * 2 + H * Npad * 2 + (H + Npad) * 4)

    def _tile_bytes(tb):                                  # double-buffered x tile + out tile
        return 2 * (tb * D * 4 + tb * Npad * 4)

    TB = max(16, _round_up(min(batch_tile, B), 16))       # bf16 -> 16 sublanes per vreg
    while TB > 16 and weight_bytes + _tile_bytes(TB) + (2 << 20) > vmem_budget:
        TB = max(16, _round_up(TB // 2, 16))
    # TODO(synk): if weight_bytes alone outgrows the budget (very large D*H on v7x),
    # add a K-reduction grid axis over D with an f32 accumulator instead of a
    # fully-resident W1; not needed at MLP-encoder shapes.

    grid = (pl.cdiv(B, TB),)                              # ragged last tile handled by Pallas masking
    vmem_limit = int(min(max(weight_bytes + _tile_bytes(TB) + (4 << 20), 16 << 20),
                         vmem_budget))

    flops = 2 * B * (D * H + H * Npad)
    bytes_accessed = (B * D * 4 + D * H * 2 + H * Npad * 2
                      + (H + Npad) * 4 + B * Npad * 4)
    cost = pl.CostEstimate(flops=flops, transcendentals=B * Npad,
                           bytes_accessed=bytes_accessed)

    kernel = functools.partial(_gaussian_encoder_kernel, latent_dim=M)

    out = pl.pallas_call(
        kernel,
        out_shape=jax.ShapeDtypeStruct((B, Npad), jnp.float32),
        grid=grid,
        in_specs=[
            pl.BlockSpec((TB, D), lambda i: (i, 0)),      # x: batch-tiled, f32
            pl.BlockSpec((D, H), lambda i: (0, 0)),        # W1: grid-invariant
            pl.BlockSpec((1, H), lambda i: (0, 0)),        # b1
            pl.BlockSpec((H, Npad), lambda i: (0, 0)),     # W2 packed [mean|std|pad]
            pl.BlockSpec((1, Npad), lambda i: (0, 0)),     # b2 packed
        ],
        out_specs=pl.BlockSpec((TB, Npad), lambda i: (i, 0)),
        compiler_params=pltpu.CompilerParams(
            dimension_semantics=("parallel",),             # batch axis splits over TCs
            vmem_limit_bytes=vmem_limit),
        cost_estimate=cost,
    )(x_flat, params["w1"], params["b1"], params["w2"], params["b2"])

    mean = out[:, :M]
    scale = out[:, M:2 * M]
    return mean, scale


def reference_gaussian_encoder(x, w1, b1, w2, b2, latent_dim):
    B = x.shape[0]
    x_flat = x.reshape(B, -1)
    h = jnp.maximum(x_flat @ w1 + b1, 0.0)
    y = h @ w2 + b2
    return y[:, :latent_dim], jnp.exp(y[:, latent_dim:])


if __name__ == "__main__":
    # Small shapes consistent with the module's (batch, feature_dim1, feature_dim2)
    # input.  batch_tile=16 here exercises the multi-step grid with a ragged last
    # tile (grid=(3,), 40 = 16+16+8); the default is 512 for real sizes.
    B, F1, F2 = 40, 16, 16
    D = F1 * F2            # 256
    H = 128                # hidden width of the synthetic encoder_net
    M = 16                 # latent dim -> encoder_net outputs 2M = 32

    key = jax.random.PRNGKey(0)
    kx, k1, k2, k3, k4 = jax.random.split(key, 5)
    x = jax.random.normal(kx, (B, F1, F2), dtype=jnp.float32)
    w1 = jax.random.normal(k1, (D, H), dtype=jnp.float32) * (1.0 / jnp.sqrt(D))
    b1 = jax.random.normal(k2, (1, H), dtype=jnp.float32) * 0.01
    w2 = jax.random.normal(k3, (H, 2 * M), dtype=jnp.float32) * (1.0 / jnp.sqrt(H))
    b2 = jax.random.normal(k4, (1, 2 * M), dtype=jnp.float32) * 0.01

    params = prepare_gaussian_encoder_params(w1, b1, w2, b2, M)   # one-time weight prep
    mean, scale = gaussian_encoder(x, params, batch_tile=16)
    jax.block_until_ready((mean, scale))

    ref_mean, ref_scale = reference_gaussian_encoder(x, w1, b1, w2, b2, M)
    assert mean.shape == (B, M) and scale.shape == (B, M)
    # bf16 MXU operands (f32 accumulation) -> relaxed tolerance vs. the f32 reference.
    assert jnp.allclose(mean, ref_mean, atol=2e-2, rtol=2e-2)
    assert jnp.allclose(scale, ref_scale, atol=2e-2, rtol=2e-2)
    assert bool(jnp.all(scale > 0.0))

    # TODO(synk): torch.distributions.Independent(Normal(...)) itself has no Pallas
    # equivalent; the kernel returns its sufficient parameters (mean, scale).
    print("KERNEL_OK")
</pallas_src>

<mosaic_0001>
module attributes {stable_mosaic.version = 11 : i64} {
  func.func @_gaussian_encoder_kernel(%arg0: i32, %arg1: memref<16x256xf32, #tpu.memory_space<vmem>>, %arg2: memref<256x128xbf16, #tpu.memory_space<vmem>>, %arg3: memref<1x128xf32, #tpu.memory_space<vmem>>, %arg4: memref<128x128xbf16, #tpu.memory_space<vmem>>, %arg5: memref<1x128xf32, #tpu.memory_space<vmem>>, %arg6: memref<16x128xf32, #tpu.memory_space<vmem>>) attributes {dimension_semantics = [#tpu.dimension_semantics<parallel>], iteration_bounds = array<i64: 3>, scalar_prefetch = 0 : i64, scratch_operands = 0 : i64, tpu.core_type = #tpu.core_type<tc>, window_params = [{transform_indices = @transform_0, window_bounds = array<i64: 16, 256>}, {pipeline_mode = #tpu.pipeline_mode<synchronous>, transform_indices = @transform_1, window_bounds = array<i64: 256, 128>}, {pipeline_mode = #tpu.pipeline_mode<synchronous>, transform_indices = @transform_2, window_bounds = array<i64: 1, 128>}, {pipeline_mode = #tpu.pipeline_mode<synchronous>, transform_indices = @transform_3, window_bounds = array<i64: 128, 128>}, {pipeline_mode = #tpu.pipeline_mode<synchronous>, transform_indices = @transform_4, window_bounds = array<i64: 1, 128>}, {transform_indices = @transform_5, window_bounds = array<i64: 16, 128>}]} {
    %c0 = arith.constant 0 : index
    %c0_0 = arith.constant 0 : index
    %0 = vector.load %arg1[%c0, %c0_0] : memref<16x256xf32, #tpu.memory_space<vmem>>, vector<16x256xf32>
    %1 = arith.truncf %0 : vector<16x256xf32> to vector<16x256xbf16>
    %c0_1 = arith.constant 0 : index
    %c0_2 = arith.constant 0 : index
    %2 = vector.load %arg2[%c0_1, %c0_2] : memref<256x128xbf16, #tpu.memory_space<vmem>>, vector<256x128xbf16>
    %cst = arith.constant dense<0.000000e+00> : vector<16x128xf32>
    %3 = tpu.matmul %1, %2, %cst {dimension_numbers = #tpu.dot_dimension_numbers<[1], [0], [0], [1], [0, 0, 1, 1], [], []>} : vector<16x256xbf16>, vector<256x128xbf16>, vector<16x128xf32> -> vector<16x128xf32>
    %c0_3 = arith.constant 0 : index
    %c0_4 = arith.constant 0 : index
    %4 = vector.load %arg3[%c0_3, %c0_4] : memref<1x128xf32, #tpu.memory_space<vmem>>, vector<1x128xf32>
    %5 = vector.broadcast %4 : vector<1x128xf32> to vector<16x128xf32>
    %6 = arith.addf %3, %5 : vector<16x128xf32>
    %cst_5 = arith.constant 0.000000e+00 : f32
    %7 = vector.broadcast %cst_5 : f32 to vector<16x128xf32>
    %8 = arith.maximumf %6, %7 : vector<16x128xf32>
    %9 = arith.truncf %8 : vector<16x128xf32> to vector<16x128xbf16>
    %c0_6 = arith.constant 0 : index
    %c0_7 = arith.constant 0 : index
    %10 = vector.load %arg4[%c0_6, %c0_7] : memref<128x128xbf16, #tpu.memory_space<vmem>>, vector<128x128xbf16>
    %cst_8 = arith.constant dense<0.000000e+00> : vector<16x128xf32>
    %11 = tpu.matmul %9, %10, %cst_8 {dimension_numbers = #tpu.dot_dimension_numbers<[1], [0], [0], [1], [0, 0, 1, 1], [], []>} : vector<16x128xbf16>, vector<128x128xbf16>, vector<16x128xf32> -> vector<16x128xf32>
    %c0_9 = arith.constant 0 : index
    %c0_10 = arith.constant 0 : index
    %12 = vector.load %arg5[%c0_9, %c0_10] : memref<1x128xf32, #tpu.memory_space<vmem>>, vector<1x128xf32>
    %13 = vector.broadcast %12 : vector<1x128xf32> to vector<16x128xf32>
    %14 = arith.addf %11, %13 : vector<16x128xf32>
    %15 = tpu.iota {dimensions = array<i32: 1>} : vector<16x128xi32>
    %c16_i32 = arith.constant 16 : i32
    %16 = vector.broadcast %c16_i32 : i32 to vector<16x128xi32>
    %17 = arith.cmpi sge, %15, %16 : vector<16x128xi32>
    %c32_i32 = arith.constant 32 : i32
    %18 = vector.broadcast %c32_i32 : i32 to vector<16x128xi32>
    %19 = arith.cmpi slt, %15, %18 : vector<16x128xi32>
    %20 = arith.andi %17, %19 : vector<16x128xi1>
    %21 = math.exp %14 : vector<16x128xf32>
    %22 = arith.select %20, %21, %14 : vector<16x128xi1>, vector<16x128xf32>
    %c0_11 = arith.constant 0 : index
    %c0_12 = arith.constant 0 : index
    %23 = vector.load %arg6[%c0_11, %c0_12] : memref<16x128xf32, #tpu.memory_space<vmem>>, vector<16x128xf32>
    tpu.vector_store %arg6[%c0_11, %c0_12], %22 {strides = array<i32>} : memref<16x128xf32, #tpu.memory_space<vmem>>, vector<16x128xf32>,
    return
  }
  func.func @transform_0(%arg0: i32) -> (i32, i32) {
    %c0_i32 = arith.constant 0 : i32
    %c0_i32_0 = arith.constant 0 : i32
    return %arg0, %c0_i32 : i32, i32
  }
  func.func @transform_1(%arg0: i32) -> (i32, i32) {
    %c0_i32 = arith.constant 0 : i32
    %c0_i32_0 = arith.constant 0 : i32
    %c0_i32_1 = arith.constant 0 : i32
    return %c0_i32, %c0_i32_0 : i32, i32
  }
  func.func @transform_2(%arg0: i32) -> (i32, i32) {
    %c0_i32 = arith.constant 0 : i32
    %c0_i32_0 = arith.constant 0 : i32
    %c0_i32_1 = arith.constant 0 : i32
    return %c0_i32, %c0_i32_0 : i32, i32
  }
  func.func @transform_3(%arg0: i32) -> (i32, i32) {
    %c0_i32 = arith.constant 0 : i32
    %c0_i32_0 = arith.constant 0 : i32
    %c0_i32_1 = arith.constant 0 : i32
    return %c0_i32, %c0_i32_0 : i32, i32
  }
  func.func @transform_4(%arg0: i32) -> (i32, i32) {
    %c0_i32 = arith.constant 0 : i32
    %c0_i32_0 = arith.constant 0 : i32
    %c0_i32_1 = arith.constant 0 : i32
    return %c0_i32, %c0_i32_0 : i32, i32
  }
  func.func @transform_5(%arg0: i32) -> (i32, i32) {
    %c0_i32 = arith.constant 0 : i32
    %c0_i32_0 = arith.constant 0 : i32
    return %arg0, %c0_i32 : i32, i32
  }
}

</mosaic_0001>

<llo_original>
// kernel: tpu_custom_call.1
$region0: #{tpu_custom_call.1}
  #allocation0 [shape = 'u32[]', space=smem, size = 0x4, offset = 0x4, fixed_abs, tag = 'smem constant byte address 0x4 - core index']
  #allocation1 [shape = 'u32[144,128]{1,0:T(1,128)}', space=vmem, size = 0x12000, scoped, tag = 'internal scratch']
  %s0 = inlined_call_operand.hbm [shape: f32[40,256], index: 0, kind: input, shape index: {}]
  %s1 = inlined_call_operand.hbm [shape: bf16[256,128], index: 1, kind: input, shape index: {}]
  %s2 = inlined_call_operand.vmem [shape: f32[1,128], index: 2, kind: input, shape index: {}]
  %s3 = inlined_call_operand.hbm [shape: bf16[128,128], index: 3, kind: input, shape index: {}]
  %s4 = inlined_call_operand.vmem [shape: f32[1,128], index: 4, kind: input, shape index: {}]
  %s5 = inlined_call_operand.hbm [shape: f32[40,128], index: 5, kind: output, shape index: {}]
  %s6 = sld [smem:[#allocation0]]
  $region65: #{tpu_custom_call.1} parent=0
    _
  %s8 = ssub.s32 1, %s6
  %s9 = scalar_select 0, %s8, %s6
  $region1: #{tpu_custom_call.1} parent=0
    #allocation2 [shape = 'u8[32768]{0}', space=vmem, size = 0x8000, scoped, tag = 'input window, operand 0']
    #allocation3 [shape = 's32[2]{0}', space=sflag, size = 0x8, scoped, tag = 'scoped memory for tpu_custom_call.1']
    #allocation4 [shape = 's32[2]{0}', space=sflag, size = 0x8, scoped, tag = 'scoped memory for tpu_custom_call.1']
    #allocation5 [shape = 'u8[65536]{0}', space=vmem, size = 0x10000, scoped, tag = 'input window, operand 1, single buffered']
    #allocation6 [shape = 's32[1]{0}', space=sflag, size = 0x4, scoped, tag = 'scoped memory for tpu_custom_call.1']
    #allocation7 [shape = 'u8[32768]{0}', space=vmem, size = 0x8000, scoped, tag = 'input window, operand 3, single buffered']
    #allocation8 [shape = 'u8[16384]{0}', space=vmem, size = 0x4000, scoped, tag = 'output window, operand 0']
    %10 = vsyncpa [#allocation3], 0
    %s11 = scalar_lea.sflag [#allocation3], 1
    %12 = vsyncpa %s11, 0
    %13 = vsyncpa [#allocation6], 0
    %14 = vsyncpa [#allocation4], 0
    %s15 = scalar_lea.sflag [#allocation4], 1
    %16 = vsyncpa %s15, 0
    loop: start=0, step=1, limit=5
    $region2: #{tpu_custom_call.1} parent=1 // loop_pre_header
      _
    $region3: #{tpu_custom_call.1} parent=1 // loop_header
      %s18 = sphi 0, %s22
      %p19 = scmp.ge.s32.totalorder %s18, 5
      %s28 = sphi 0, %s30
      %s31 = sphi 0, %s28
      %s32 = sphi 0, %s31
      %s48 = sphi 0, %s32
      %s52 = sphi 0, %s52
      %s54 = sphi 0, %s52
      %s55 = sphi 0, %s54
      %s69 = sphi 0, %s55
      %s73 = sphi 0, %s73
      %s75 = sphi 0, %s73
      %s76 = sphi 0, %s75
      %s90 = sphi 0, %s76
      %s94 = sphi 0, %s94
      %s96 = sphi 0, %s94
      %s97 = sphi 0, %s96
      %s111 = sphi 0, %s97
      %s115 = sphi 0, %s115
      %s117 = sphi 0, %s115
      %s118 = sphi 0, %s117
      %s132 = sphi 0, %s118
      %s138 = sphi 0, %s140
      %s141 = sphi 0, %s138
      %s142 = sphi 0, %s141
      %s158 = sphi 0, %s142
    $region4: #{tpu_custom_call.1} parent=1 // loop_header_branch
      %21 = sbr.rel (%p19) target = $region8
    $region5: #{tpu_custom_call.1} parent=1 // loop_body
      %s23 = ssub.s32 %s18, 1
      %s24 = ssub.s32 %s18, 2
      %s25 = sadd.s32 %s18, 1
      %s26 = ssub.s32 %s18, %s25
      %p27 = scmp.eq.s32.totalorder %s26, 0
      %s29 = sadd.s32 %s28, 1
      %s30 = scalar_select %p27, %s28, %s29
      %p33 = pneg %p27
      %p34 = scmp.eq.s32.totalorder %s18, 2
      %p35 = por %p33, %p34
      %p36 = scmp.ne.s32.totalorder %s28, %s31
      %p37 = scmp.eq.s32.totalorder %s18, 0
      %p38 = por %p36, %p37
      %p39 = scmp.ne.s32.totalorder %s28, %s31
      %p40 = scmp.eq.s32.totalorder %s23, 2
      %p41 = por %p39, %p40
      %p42 = scmp.ne.s32.totalorder %s31, %s32
      %p43 = scmp.eq.s32.totalorder %s23, 0
      %p44 = por %p42, %p43
      %p45 = scmp.ne.s32.totalorder %s31, %s32
      %p46 = scmp.eq.s32.totalorder %s24, 2
      %p47 = por %p45, %p46
      %p49 = scmp.ne.s32.totalorder %s32, %s48
      %p50 = scmp.eq.s32.totalorder %s24, 0
      %p51 = por %p49, %p50
      %s53 = sadd.s32 %s52, 1
      %p56 = scmp.eq.s32.totalorder %s18, 2
      %p57 = scmp.ne.s32.totalorder %s52, %s54
      %p58 = scmp.eq.s32.totalorder %s18, 0
      %p59 = por %p57, %p58
      %p60 = scmp.ne.s32.totalorder %s52, %s54
      %p61 = scmp.eq.s32.totalorder %s23, 2
      %p62 = por %p60, %p61
      %p63 = scmp.ne.s32.totalorder %s54, %s55
      %p64 = scmp.eq.s32.totalorder %s23, 0
      %p65 = por %p63, %p64
      %p66 = scmp.ne.s32.totalorder %s54, %s55
      %p67 = scmp.eq.s32.totalorder %s24, 2
      %p68 = por %p66, %p67
      %p70 = scmp.ne.s32.totalorder %s55, %s69
      %p71 = scmp.eq.s32.totalorder %s24, 0
      %p72 = por %p70, %p71
      %s74 = sadd.s32 %s73, 1
      %p77 = scmp.eq.s32.totalorder %s18, 2
      %p78 = scmp.ne.s32.totalorder %s73, %s75
      %p79 = scmp.eq.s32.totalorder %s18, 0
      %p80 = por %p78, %p79
      %p81 = scmp.ne.s32.totalorder %s73, %s75
      %p82 = scmp.eq.s32.totalorder %s23, 2
      %p83 = por %p81, %p82
      %p84 = scmp.ne.s32.totalorder %s75, %s76
      %p85 = scmp.eq.s32.totalorder %s23, 0
      %p86 = por %p84, %p85
      %p87 = scmp.ne.s32.totalorder %s75, %s76
      %p88 = scmp.eq.s32.totalorder %s24, 2
      %p89 = por %p87, %p88
      %p91 = scmp.ne.s32.totalorder %s76, %s90
      %p92 = scmp.eq.s32.totalorder %s24, 0
      %p93 = por %p91, %p92
      %s95 = sadd.s32 %s94, 1
      %p98 = scmp.eq.s32.totalorder %s18, 2
      %p99 = scmp.ne.s32.totalorder %s94, %s96
      %p100 = scmp.eq.s32.totalorder %s18, 0
      %p101 = por %p99, %p100
      %p102 = scmp.ne.s32.totalorder %s94, %s96
      %p103 = scmp.eq.s32.totalorder %s23, 2
      %p104 = por %p102, %p103
      %p105 = scmp.ne.s32.totalorder %s96, %s97
      %p106 = scmp.eq.s32.totalorder %s23, 0
      %p107 = por %p105, %p106
      %p108 = scmp.ne.s32.totalorder %s96, %s97
      %p109 = scmp.eq.s32.totalorder %s24, 2
      %p110 = por %p108, %p109
      %p112 = scmp.ne.s32.totalorder %s97, %s111
      %p113 = scmp.eq.s32.totalorder %s24, 0
      %p114 = por %p112, %p113
      %s116 = sadd.s32 %s115, 1
      %p119 = scmp.eq.s32.totalorder %s18, 2
      %p120 = scmp.ne.s32.totalorder %s115, %s117
      %p121 = scmp.eq.s32.totalorder %s18, 0
      %p122 = por %p120, %p121
      %p123 = scmp.ne.s32.totalorder %s115, %s117
      %p124 = scmp.eq.s32.totalorder %s23, 2
      %p125 = por %p123, %p124
      %p126 = scmp.ne.s32.totalorder %s117, %s118
      %p127 = scmp.eq.s32.totalorder %s23, 0
      %p128 = por %p126, %p127
      %p129 = scmp.ne.s32.totalorder %s117, %s118
      %p130 = scmp.eq.s32.totalorder %s24, 2
      %p131 = por %p129, %p130
      %p133 = scmp.ne.s32.totalorder %s118, %s132
      %p134 = scmp.eq.s32.totalorder %s24, 0
      %p135 = por %p133, %p134
      %s136 = ssub.s32 %s18, %s25
      %p137 = scmp.eq.s32.totalorder %s136, 0
      %s139 = sadd.s32 %s138, 1
      %s140 = scalar_select %p137, %s138, %s139
      %p143 = pneg %p137
      %p144 = scmp.eq.s32.totalorder %s18, 2
      %p145 = por %p143, %p144
      %p146 = scmp.ne.s32.totalorder %s138, %s141
      %p147 = scmp.eq.s32.totalorder %s18, 0
      %p148 = por %p146, %p147
      %p149 = scmp.ne.s32.totalorder %s138, %s141
      %p150 = scmp.eq.s32.totalorder %s23, 2
      %p151 = por %p149, %p150
      %p152 = scmp.ne.s32.totalorder %s141, %s142
      %p153 = scmp.eq.s32.totalorder %s23, 0
      %p154 = por %p152, %p153
      %p155 = scmp.ne.s32.totalorder %s141, %s142
      %p156 = scmp.eq.s32.totalorder %s24, 2
      %p157 = por %p155, %p156
      %p159 = scmp.ne.s32.totalorder %s142, %s158
      %p160 = scmp.eq.s32.totalorder %s24, 0
      %p161 = por %p159, %p160
      %p162 = scmp.le.s32.totalorder 1, %s18
      %p163 = scmp.lt.s32.totalorder %s18, 4
      %p164 = pnand %p162, %p163
      %p165 = pneg %p164
      // Predicated region
      $region9: #{tpu_custom_call.1} parent=5 // pred_check
        _
      $region10: #{tpu_custom_call.1} parent=5 // pred_check_branch
        %167 = sbr.rel (%p164) target = $region12
      $region11: #{tpu_custom_call.1} parent=5 // pred_region
        %s168 = ssub.s32 %s18, 1
        // Predicated region
        $region13: #{tpu_custom_call.1} parent=11 // pred_check
          %p169 = pneg %p65
        $region14: #{tpu_custom_call.1} parent=11 // pred_check_branch
          %171 = sbr.rel (%p169) target = $region16
        $region15: #{tpu_custom_call.1} parent=11 // pred_region
          %s173 = ssub.s32 2048, 2048
          %174 = vsyncadd [#allocation6], %s173
          %s175 = sshll.u32 [#allocation5], 4
          %s176 = int_to_ptr.vmem [resolvable:$true] %s175
          %181 = dma.hbm_to_vmem [thread:$0]  %s1, 2048, %s176, [#allocation6], 64, 64, 4
        $region16: #{tpu_custom_call.1} parent=11 // pred_fallthru
          _
        // Predicated region
        $region17: #{tpu_custom_call.1} parent=11 // pred_check
          %p182 = pneg %p86
        $region18: #{tpu_custom_call.1} parent=11 // pred_check_branch
          %184 = sbr.rel (%p182) target = $region20
        $region19: #{tpu_custom_call.1} parent=11 // pred_region
          _
        $region20: #{tpu_custom_call.1} parent=11 // pred_fallthru
          _
        // Predicated region
        $region21: #{tpu_custom_call.1} parent=11 // pred_check
          %p185 = pneg %p107
        $region22: #{tpu_custom_call.1} parent=11 // pred_check_branch
          %187 = sbr.rel (%p185) target = $region24
        $region23: #{tpu_custom_call.1} parent=11 // pred_region
          %s189 = ssub.s32 1024, 1024
          %190 = vsyncadd [#allocation6], %s189
          %s191 = sshll.u32 [#allocation7], 4
          %s192 = int_to_ptr.vmem [resolvable:$true] %s191
          %197 = dma.hbm_to_vmem [thread:$0]  %s3, 1024, %s192, [#allocation6], 64, 64, 4
        $region24: #{tpu_custom_call.1} parent=11 // pred_fallthru
          _
        // Predicated region
        $region25: #{tpu_custom_call.1} parent=11 // pred_check
          %p198 = pneg %p128
        $region26: #{tpu_custom_call.1} parent=11 // pred_check_branch
          %200 = sbr.rel (%p198) target = $region28
        $region27: #{tpu_custom_call.1} parent=11 // pred_region
          _
        $region28: #{tpu_custom_call.1} parent=11 // pred_fallthru
          _
      $region12: #{tpu_custom_call.1} parent=5 // pred_fallthru
        _
      %p201 = scmp.lt.s32.totalorder %s18, 3
      // Predicated region
      $region29: #{tpu_custom_call.1} parent=5 // pred_check
        %p202 = pneg %p201
      $region30: #{tpu_custom_call.1} parent=5 // pred_check_branch
        %204 = sbr.rel (%p202) target = $region32
      $region31: #{tpu_custom_call.1} parent=5 // pred_region
        // Predicated region
        $region33: #{tpu_custom_call.1} parent=31 // pred_check
          %p205 = pneg %p38
        $region34: #{tpu_custom_call.1} parent=31 // pred_check_branch
          %207 = sbr.rel (%p205) target = $region36
        $region35: #{tpu_custom_call.1} parent=31 // pred_region
          %s208 = sand.u32 %s28, 1
          %s209 = scalar_lea.sflag [#allocation3], %s208
          %s210 = sand.u32 %s28, 1
          %s211 = smul.addr %s210, 32
          %s212 = scalar_lea.vmem [#allocation2], %s211
          %s213 = smul.u32 2, %s18
          %s214 = ssub.s32 5, %s213
          %p215 = scmp.lt.s32.totalorder %s214, 2
          %s216 = scalar_select %p215, %s214, 2
          %s217 = smul.u32 128, %s216
          %s218 = smul.u32 %s217, 2
          %s220 = ssub.s32 512, %s218
          %221 = vsyncadd %s209, %s220
          %p222 = scmp.ne.s32.totalorder 0, %s218
          %s223 = smul.addr %s213, 2
          %s224 = smul.addr %s223, 128
          %s225 = scalar_lea.hbm %s0, %s224
          %s226 = smul.u32 16, %s216
          %s227 = sshll.u32 %s212, 4
          %s228 = int_to_ptr.vmem [resolvable:$true] %s227
          %s229 = sshll.u32 %s226, 4
          %233 = dma.hbm_to_vmem [thread:$0]  (%p222), %s225, %s229, %s228, %s209, 256, 256, 16
        $region36: #{tpu_custom_call.1} parent=31 // pred_fallthru
          _
      $region32: #{tpu_custom_call.1} parent=5 // pred_fallthru
        _
      %p234 = scmp.le.s32.totalorder 1, %s18
      %p235 = scmp.lt.s32.totalorder %s18, 4
      %p236 = pnand %p234, %p235
      %p237 = pneg %p236
      // Predicated region
      $region37: #{tpu_custom_call.1} parent=5 // pred_check
        _
      $region38: #{tpu_custom_call.1} parent=5 // pred_check_branch
        %239 = sbr.rel (%p236) target = $region40
      $region39: #{tpu_custom_call.1} parent=5 // pred_region
        %s240 = ssub.s32 %s18, 1
        %s241 = sand.u32 %s31, 1
        %s242 = scalar_lea.sflag [#allocation3], %s241
        %s243 = sand.u32 %s31, 1
        %s244 = smul.addr %s243, 32
        %s245 = scalar_lea.vmem [#allocation2], %s244
        // Predicated region
        $region41: #{tpu_custom_call.1} parent=39 // pred_check
          %p246 = pneg %p44
        $region42: #{tpu_custom_call.1} parent=39 // pred_check_branch
          %248 = sbr.rel (%p246) target = $region44
        $region43: #{tpu_custom_call.1} parent=39 // pred_region
          %249 = dma.done %s242, 512
        $region44: #{tpu_custom_call.1} parent=39 // pred_fallthru
          _
        // Predicated region
        $region45: #{tpu_custom_call.1} parent=39 // pred_check
          %p250 = pneg %p65
        $region46: #{tpu_custom_call.1} parent=39 // pred_check_branch
          %252 = sbr.rel (%p250) target = $region48
        $region47: #{tpu_custom_call.1} parent=39 // pred_region
          %253 = dma.done [#allocation6], 2048
        $region48: #{tpu_custom_call.1} parent=39 // pred_fallthru
          _
        // Predicated region
        $region49: #{tpu_custom_call.1} parent=39 // pred_check
          %p254 = pneg %p107
        $region50: #{tpu_custom_call.1} parent=39 // pred_check_branch
          %256 = sbr.rel (%p254) target = $region52
        $region51: #{tpu_custom_call.1} parent=39 // pred_region
          %257 = dma.done [#allocation6], 1024
        $region52: #{tpu_custom_call.1} parent=39 // pred_fallthru
          _
        %s258 = sand.u32 %s31, 1
        %s259 = scalar_lea.sflag [#allocation3], %s258
        %s260 = sand.u32 %s31, 1
        %s261 = smul.addr %s260, 32
        %s262 = scalar_lea.vmem [#allocation2], %s261
        %p263 = pneg %p44
        %p264 = pneg %p41
        %p265 = pneg %p65
        %p266 = pneg %p62
        %p267 = pneg %p86
        %p268 = pneg %p83
        %p269 = pneg %p107
        %p270 = pneg %p104
        %p271 = pneg %p128
        %p272 = pneg %p125
        %p273 = pneg %p154
        %p274 = pneg %p151
        %s275 = sand.u32 %s141, 1
        %s276 = scalar_lea.sflag [#allocation4], %s275
        %s277 = sand.u32 %s141, 1
        %s278 = smul.addr %s277, 16
        %s279 = scalar_lea.vmem [#allocation8], %s278
        %s280 = smul.u32 2, %s23
        %s281 = ssub.s32 5, %s280
        %p282 = scmp.lt.s32.totalorder %s281, 2
        %s283 = scalar_select %p282, %s281, 2
        %s284 = smul.u32 128, %s283
        %s285 = smul.u32 %s284, 2
        %s286 = smul.u32 2, %s23
        %s287 = ssub.s32 5, %s286
        %p288 = scmp.lt.s32.totalorder %s287, 2
        %s289 = scalar_select %p288, %s287, 2
        %s290 = smul.u32 128, %s289
        %v292 = vld [vmem:[%s245] sm:$0xff]
        %v293 = vld [vmem:[%s245 + $0x8] sm:$0xff]
        %v294 = vld [vmem:[%s245 + $0x10] sm:$0xff]
        %v295 = vld [vmem:[%s245 + $0x18] sm:$0xff]
        %v296 = vpack.c.bf16 %v294, %v292
        %v297 = vpack.c.bf16 %v295, %v293
        %v298 = vld [vmem:[#allocation5] sm:$0xf]
        %v299 = vld [vmem:[#allocation5 + $0x4] sm:$0xf]
        %v300 = vld [vmem:[#allocation5 + $0x8] sm:$0xf]
        %v301 = vld [vmem:[#allocation5 + $0xc] sm:$0xf]
        %v302 = vld [vmem:[#allocation5 + $0x10] sm:$0xf]
        %v303 = vld [vmem:[#allocation5 + $0x14] sm:$0xf]
        %v304 = vld [vmem:[#allocation5 + $0x18] sm:$0xf]
        %v305 = vld [vmem:[#allocation5 + $0x1c] sm:$0xf]
        %v306 = vld [vmem:[#allocation5 + $0x20] sm:$0xf]
        %v307 = vld [vmem:[#allocation5 + $0x24] sm:$0xf]
        %v308 = vld [vmem:[#allocation5 + $0x28] sm:$0xf]
        %v309 = vld [vmem:[#allocation5 + $0x2c] sm:$0xf]
        %v310 = vld [vmem:[#allocation5 + $0x30] sm:$0xf]
        %v311 = vld [vmem:[#allocation5 + $0x34] sm:$0xf]
        %v312 = vld [vmem:[#allocation5 + $0x38] sm:$0xf]
        %v313 = vld [vmem:[#allocation5 + $0x3c] sm:$0xf]
        %v314 = vld [vmem:[#allocation5 + $0x40] sm:$0xf]
        %v315 = vld [vmem:[#allocation5 + $0x44] sm:$0xf]
        %v316 = vld [vmem:[#allocation5 + $0x48] sm:$0xf]
        %v317 = vld [vmem:[#allocation5 + $0x4c] sm:$0xf]
        %v318 = vld [vmem:[#allocation5 + $0x50] sm:$0xf]
        %v319 = vld [vmem:[#allocation5 + $0x54] sm:$0xf]
        %v320 = vld [vmem:[#allocation5 + $0x58] sm:$0xf]
        %v321 = vld [vmem:[#allocation5 + $0x5c] sm:$0xf]
        %v322 = vld [vmem:[#allocation5 + $0x60] sm:$0xf]
        %v323 = vld [vmem:[#allocation5 + $0x64] sm:$0xf]
        %v324 = vld [vmem:[#allocation5 + $0x68] sm:$0xf]
        %v325 = vld [vmem:[#allocation5 + $0x6c] sm:$0xf]
        %v326 = vld [vmem:[#allocation5 + $0x70] sm:$0xf]
        %v327 = vld [vmem:[#allocation5 + $0x74] sm:$0xf]
        %v328 = vld [vmem:[#allocation5 + $0x78] sm:$0xf]
        %v329 = vld [vmem:[#allocation5 + $0x7c] sm:$0xf]
        %v330 = vld [vmem:[%s2] sm:$0x1]
        %v332 = vlaneseq
        %v333 = vshrl.u32 %v332, 7
        %v334 = vsub.s32 0, %v333
        %v335 = vrot.slane %v330, %v334
        %v369 = vunpack.c.l.b16 %v298
        %v370 = vunpack.c.l.b16 %v299
        %v371 = vunpack.c.l.b16 %v300
        %v372 = vunpack.c.l.b16 %v301
        %v373 = vunpack.c.l.b16 %v302
        %v374 = vunpack.c.l.b16 %v303
        %v375 = vunpack.c.l.b16 %v304
        %v376 = vunpack.c.l.b16 %v305
        %v377 = vunpack.c.l.b16 %v306
        %v378 = vunpack.c.l.b16 %v307
        %v379 = vunpack.c.l.b16 %v308
        %v380 = vunpack.c.l.b16 %v309
        %v381 = vunpack.c.l.b16 %v310
        %v382 = vunpack.c.l.b16 %v311
        %v383 = vunpack.c.l.b16 %v312
        %v384 = vunpack.c.l.b16 %v313
        %v385 = vunpack.c.l.b16 %v314
        %v386 = vunpack.c.l.b16 %v315
        %v387 = vunpack.c.l.b16 %v316
        %v388 = vunpack.c.l.b16 %v317
        %v389 = vunpack.c.l.b16 %v318
        %v390 = vunpack.c.l.b16 %v319
        %v391 = vunpack.c.l.b16 %v320
        %v392 = vunpack.c.l.b16 %v321
        %v393 = vunpack.c.l.b16 %v322
        %v394 = vunpack.c.l.b16 %v323
        %v395 = vunpack.c.l.b16 %v324
        %v396 = vunpack.c.l.b16 %v325
        %v397 = vunpack.c.l.b16 %v326
        %v398 = vunpack.c.l.b16 %v327
        %v399 = vunpack.c.l.b16 %v328
        %v400 = vunpack.c.l.b16 %v329
        %v401 = vpack.c.b16 %v370, %v369
        %v402 = vpack.c.b16 %v372, %v371
        %v403 = vpack.c.b16 %v374, %v373
        %v404 = vpack.c.b16 %v376, %v375
        %v405 = vpack.c.b16 %v378, %v377
        %v406 = vpack.c.b16 %v380, %v379
        %v407 = vpack.c.b16 %v382, %v381
        %v408 = vpack.c.b16 %v384, %v383
        %v409 = vpack.c.b16 %v386, %v385
        %v410 = vpack.c.b16 %v388, %v387
        %v411 = vpack.c.b16 %v390, %v389
        %v412 = vpack.c.b16 %v392, %v391
        %v413 = vpack.c.b16 %v394, %v393
        %v414 = vpack.c.b16 %v396, %v395
        %v415 = vpack.c.b16 %v398, %v397
        %v416 = vpack.c.b16 %v400, %v399
        %433 = vmatprep.subr.bf16.mxu0 0
        %434 = vmatpush1.bf16.msra.mxu0 %v408
        %435 = vmatprep.subr.bf16.mxu0 0
        %436 = vmatpush1.bf16.msra.mxu0 %v407
        %437 = vmatprep.subr.bf16.mxu0 0
        %438 = vmatpush1.bf16.msra.mxu0 %v406
        %439 = vmatprep.subr.bf16.mxu0 0
        %440 = vmatpush1.bf16.msra.mxu0 %v405
        %441 = vmatprep.subr.bf16.mxu0 0
        %442 = vmatpush1.bf16.msra.mxu0 %v404
        %443 = vmatprep.subr.bf16.mxu0 0
        %444 = vmatpush1.bf16.msra.mxu0 %v403
        %445 = vmatprep.subr.bf16.mxu0 0
        %446 = vmatpush1.bf16.msra.mxu0 %v402
        %447 = vmatprep.subr.bf16.mxu0 0
        %448 = vmatpush1.bf16.msra.mxu0 %v401
        %449 = vmatprep.subr.bf16.mxu0 0
        %450 = vmatpush2.bf16.msra.mxu0 %v416
        %451 = vmatprep.subr.bf16.mxu0 0
        %452 = vmatpush2.bf16.msra.mxu0 %v415
        %453 = vmatprep.subr.bf16.mxu0 0
        %454 = vmatpush2.bf16.msra.mxu0 %v414
        %455 = vmatprep.subr.bf16.mxu0 0
        %456 = vmatpush2.bf16.msra.mxu0 %v413
        %457 = vmatprep.subr.bf16.mxu0 0
        %458 = vmatpush2.bf16.msra.mxu0 %v412
        %459 = vmatprep.subr.bf16.mxu0 0
        %460 = vmatpush2.bf16.msra.mxu0 %v411
        %461 = vmatprep.subr.bf16.mxu0 0
        %462 = vmatpush2.bf16.msra.mxu0 %v410
        %463 = vmatprep.subr.bf16.mxu0 0
        %464 = vmatpush2.bf16.msra.mxu0 %v409
        %465 = vmatprep.mubr.bf16.mxu0 %v297
        %466 = vmatmul.mubr.bf16.gmra.mxu0 %v296
        %v467 = vpop.f32.mrf.mxu0
        %v468 = vadd.f32 %v335, %v467
        %v469 = vpop.f32.mrf.mxu0
        %v470 = vpop.f32.mrf.mxu0
        %v471 = vadd.f32 %v335, %v470
        %v472 = vpop.f32.mrf.mxu0
        %473 = vdwg.mxu0
        %v474 = vmax.f32 %v468, 0.0
        %v475 = vmax.f32 %v471, 0.0
        %v476 = vpack.c.bf16 %v475, %v474
        %v477 = vld [vmem:[#allocation7] sm:$0xf]
        %v478 = vld [vmem:[#allocation7 + $0x4] sm:$0xf]
        %v479 = vld [vmem:[#allocation7 + $0x8] sm:$0xf]
        %v480 = vld [vmem:[#allocation7 + $0xc] sm:$0xf]
        %v481 = vld [vmem:[#allocation7 + $0x10] sm:$0xf]
        %v482 = vld [vmem:[#allocation7 + $0x14] sm:$0xf]
        %v483 = vld [vmem:[#allocation7 + $0x18] sm:$0xf]
        %v484 = vld [vmem:[#allocation7 + $0x1c] sm:$0xf]
        %v485 = vld [vmem:[#allocation7 + $0x20] sm:$0xf]
        %v486 = vld [vmem:[#allocation7 + $0x24] sm:$0xf]
        %v487 = vld [vmem:[#allocation7 + $0x28] sm:$0xf]
        %v488 = vld [vmem:[#allocation7 + $0x2c] sm:$0xf]
        %v489 = vld [vmem:[#allocation7 + $0x30] sm:$0xf]
        %v490 = vld [vmem:[#allocation7 + $0x34] sm:$0xf]
        %v491 = vld [vmem:[#allocation7 + $0x38] sm:$0xf]
        %v492 = vld [vmem:[#allocation7 + $0x3c] sm:$0xf]
        %v493 = vld [vmem:[%s4] sm:$0x1]
        %v495 = vlaneseq
        %v496 = vshrl.u32 %v495, 7
        %v497 = vsub.s32 0, %v496
        %v498 = vrot.slane %v493, %v497
        %v516 = vunpack.c.l.b16 %v477
        %v517 = vunpack.c.l.b16 %v478
        %v518 = vunpack.c.l.b16 %v479
        %v519 = vunpack.c.l.b16 %v480
        %v520 = vunpack.c.l.b16 %v481
        %v521 = vunpack.c.l.b16 %v482
        %v522 = vunpack.c.l.b16 %v483
        %v523 = vunpack.c.l.b16 %v484
        %v524 = vunpack.c.l.b16 %v485
        %v525 = vunpack.c.l.b16 %v486
        %v526 = vunpack.c.l.b16 %v487
        %v527 = vunpack.c.l.b16 %v488
        %v528 = vunpack.c.l.b16 %v489
        %v529 = vunpack.c.l.b16 %v490
        %v530 = vunpack.c.l.b16 %v491
        %v531 = vunpack.c.l.b16 %v492
        %v532 = vpack.c.b16 %v517, %v516
        %v533 = vpack.c.b16 %v519, %v518
        %v534 = vpack.c.b16 %v521, %v520
        %v535 = vpack.c.b16 %v523, %v522
        %v536 = vpack.c.b16 %v525, %v524
        %v537 = vpack.c.b16 %v527, %v526
        %v538 = vpack.c.b16 %v529, %v528
        %v539 = vpack.c.b16 %v531, %v530
        %548 = vmatprep.subr.bf16.mxu0 0
        %549 = vmatpush1.bf16.msra.mxu0 %v539
        %550 = vmatprep.subr.bf16.mxu0 0
        %551 = vmatpush1.bf16.msra.mxu0 %v538
        %552 = vmatprep.subr.bf16.mxu0 0
        %553 = vmatpush1.bf16.msra.mxu0 %v537
        %554 = vmatprep.subr.bf16.mxu0 0
        %555 = vmatpush1.bf16.msra.mxu0 %v536
        %556 = vmatprep.subr.bf16.mxu0 0
        %557 = vmatpush1.bf16.msra.mxu0 %v535
        %558 = vmatprep.subr.bf16.mxu0 0
        %559 = vmatpush1.bf16.msra.mxu0 %v534
        %560 = vmatprep.subr.bf16.mxu0 0
        %561 = vmatpush1.bf16.msra.mxu0 %v533
        %562 = vmatprep.subr.bf16.mxu0 0
        %563 = vmatpush1.bf16.msra.mxu0 %v532
        %564 = vmatprep.subr.bf16.mxu0 0
        %565 = vmatpush2.bf16.msra.mxu0 0
        %566 = vmatprep.subr.bf16.mxu0 0
        %567 = vmatpush2.bf16.msra.mxu0 0
        %568 = vmatprep.subr.bf16.mxu0 0
        %569 = vmatpush2.bf16.msra.mxu0 0
        %570 = vmatprep.subr.bf16.mxu0 0
        %571 = vmatpush2.bf16.msra.mxu0 0
        %572 = vmatprep.subr.bf16.mxu0 0
        %573 = vmatpush2.bf16.msra.mxu0 0
        %574 = vmatprep.subr.bf16.mxu0 0
        %575 = vmatpush2.bf16.msra.mxu0 0
        %576 = vmatprep.subr.bf16.mxu0 0
        %577 = vmatpush2.bf16.msra.mxu0 0
        %578 = vmatprep.subr.bf16.mxu0 0
        %579 = vmatpush2.bf16.msra.mxu0 0
        %580 = vmatprep.mubr.bf16.mxu0 0
        %581 = vmatmul.mubr.bf16.gmra.mxu0 %v476
        %v582 = vpop.f32.mrf.mxu0
        %v583 = vadd.f32 %v498, %v582
        %v584 = vpop.f32.mrf.mxu0
        %v585 = vpop.f32.mrf.mxu0
        %v586 = vadd.f32 %v498, %v585
        %v587 = vpop.f32.mrf.mxu0
        %588 = vdwg.mxu0
        %v589 = vlaneseq
        %v590 = vand.u32 %v589, 127
        %vm591 = vcmp.ge.s32.totalorder %v590, 16
        %vm592 = vcmp.lt.s32.totalorder %v590, 32
        %vm593 = vmand %vm591, %vm592
        %v594 = vmul.f32 %v583, 1.442695
        %v595 = vpow.pop %v594
        %v596 = vmul.f32 %v586, 1.442695
        %v597 = vpow.pop %v596
        %v598 = vsel %vm593, %v595, %v583
        %v599 = vsel %vm593, %v597, %v586
        %600 = vst [vmem:[%s279] sm:$0xff] %v598
        %601 = vst [vmem:[%s279 + $0x8] sm:$0xff] %v599
        %s602 = sand.u32 %s141, 1
        %s603 = scalar_lea.sflag [#allocation4], %s602
        %s604 = sand.u32 %s141, 1
        %s605 = smul.addr %s604, 16
        %s606 = scalar_lea.vmem [#allocation8], %s605
        // Predicated region
        $region53: #{tpu_custom_call.1} parent=39 // pred_check
          %p607 = pneg %p151
        $region54: #{tpu_custom_call.1} parent=39 // pred_check_branch
          %609 = sbr.rel (%p607) target = $region56
        $region55: #{tpu_custom_call.1} parent=39 // pred_region
          %s610 = smul.u32 2, %s23
          %s611 = ssub.s32 5, %s610
          %p612 = scmp.lt.s32.totalorder %s611, 2
          %s613 = scalar_select %p612, %s611, 2
          %s614 = smul.u32 128, %s613
          %s616 = ssub.s32 256, %s614
          %617 = vsyncadd %s603, %s616
          %p618 = scmp.ne.s32.totalorder 0, %s614
          %s619 = smul.addr %s610, 128
          %s620 = scalar_lea.hbm %s5, %s619
          %s621 = smul.u32 8, %s613
          %s622 = sshll.u32 %s606, 4
          %s623 = int_to_ptr.vmem [resolvable:$true] %s622
          %s624 = sshll.u32 %s621, 4
          %628 = dma.vmem_to_hbm [thread:$0]  (%p618), %s623, %s624, %s620, %s603, 128, 128, 8
        $region56: #{tpu_custom_call.1} parent=39 // pred_fallthru
          _
      $region40: #{tpu_custom_call.1} parent=5 // pred_fallthru
        _
      %p629 = scmp.le.s32.totalorder 2, %s18
      // Predicated region
      $region57: #{tpu_custom_call.1} parent=5 // pred_check
        %p630 = pneg %p629
      $region58: #{tpu_custom_call.1} parent=5 // pred_check_branch
        %632 = sbr.rel (%p630) target = $region60
      $region59: #{tpu_custom_call.1} parent=5 // pred_region
        %s633 = ssub.s32 %s18, 2
        // Predicated region
        $region61: #{tpu_custom_call.1} parent=59 // pred_check
          %p634 = pneg %p157
        $region62: #{tpu_custom_call.1} parent=59 // pred_check_branch
          %636 = sbr.rel (%p634) target = $region64
        $region63: #{tpu_custom_call.1} parent=59 // pred_region
          %s637 = sand.u32 %s142, 1
          %s638 = scalar_lea.sflag [#allocation4], %s637
          %s639 = sand.u32 %s142, 1
          %s640 = smul.addr %s639, 16
          %s641 = scalar_lea.vmem [#allocation8], %s640
          %642 = dma.done %s638, 256
        $region64: #{tpu_custom_call.1} parent=59 // pred_fallthru
          _
      $region60: #{tpu_custom_call.1} parent=5 // pred_fallthru
        _
    $region6: #{tpu_custom_call.1} parent=1 // loop_footer
      %s22 = sadd.s32 1, %s18
    $region7: #{tpu_custom_call.1} parent=1 // loop_footer_branch
      %17 = sbr.rel target = $region3
    $region8: #{tpu_custom_call.1} parent=1 // loop_exit
      _
    %643 = vsyncpa [#allocation3], 1
    %s644 = scalar_lea.sflag [#allocation3], 1
    %645 = vsyncpa %s644, 1
    %646 = vsyncpa [#allocation6], 1
    %647 = vsyncpa [#allocation4], 1
    %s648 = scalar_lea.sflag [#allocation4], 1
    %649 = vsyncpa %s648, 1

</llo_original>
